<compile_context>
chip_gen: v6e
topology: v6e:2x2x1
jax: 0.10.0
libtpu: 0.0.40
codegen_flags: <defaults>
</compile_context>

<pallas_src>
import functools

import jax
import jax.numpy as jnp
from jax import lax
from jax.experimental import pallas as pl
from jax.experimental.pallas import tpu as pltpu


def _cdiv(a, b):
    return (a + b - 1) // b


def _round_up(x, m):
    return _cdiv(x, m) * m


def _physical_vmem_bytes():
    try:
        info = pltpu.get_tpu_info()
        for attr in ("vmem_capacity_bytes", "vmem_bytes", "vmem_size_bytes"):
            v = getattr(info, attr, None)
            if v:
                return int(v)
    except Exception:
        pass
    return 64 * 1024 * 1024  # conservative fallback == v7x per-TC VMEM


def _vmem_limit_bytes():
    # ~3/4 of physical VMEM: ~96 MiB on v5e/v6e (128 MiB), ~48 MiB on v7x.
    return (_physical_vmem_bytes() * 3) // 4


def _sublane_align(dtype):
    # 16-bit dtypes pack 2 rows per sublane -> align rows to 16; 32-bit to 8.
    return 16 if jnp.dtype(dtype).itemsize == 2 else 8


def _balanced_row_tile(n_rows, max_rows, align):
    """Largest roughly-even, sublane-aligned tile <= max_rows.

    Keeps zero-padding below one tile (avoids e.g. R=520 padding to 1024).
    """
    max_rows = max(align, (max_rows // align) * align)
    n_tiles = max(1, _cdiv(n_rows, max_rows))
    return _round_up(_cdiv(n_rows, n_tiles), align)


# ----------------------------- LayerNorm kernel -----------------------------
def _layernorm_kernel(x_ref, g_ref, b_ref, o_ref, *, eps):
    # x_ref: (tile_rows, D), g_ref/b_ref: (1, D)
    x = x_ref[...].astype(jnp.float32)
    mean = jnp.mean(x, axis=-1, keepdims=True)
    xc = x - mean
    var = jnp.mean(xc * xc, axis=-1, keepdims=True)
    inv = lax.rsqrt(var + eps)
    y = xc * inv * g_ref[...].astype(jnp.float32) + b_ref[...].astype(jnp.float32)
    o_ref[...] = y.astype(o_ref.dtype)


def layer_norm(x, gamma, beta, *, eps=1e-5):
    """LayerNorm over the last dim via Pallas (used by the generic pre_norm)."""
    *lead, D = x.shape
    R = 1
    for s in lead:
        R *= s
    xf = x.reshape(R, D)

    align = _sublane_align(x.dtype)
    vmem_limit = _vmem_limit_bytes()
    x_b = jnp.dtype(x.dtype).itemsize
    # double-buffered in + out tile plus an f32 working copy, per row.
    per_row = 4 * D * x_b + D * 4
    max_rows = min(2048, max(align, int(vmem_limit * 0.7) // max(per_row, 1)))
    tile = _balanced_row_tile(R, max_rows, align)
    R_pad = _round_up(R, tile)
    if R_pad != R:
        xf = jnp.pad(xf, ((0, R_pad - R), (0, 0)))

    out = pl.pallas_call(
        functools.partial(_layernorm_kernel, eps=eps),
        out_shape=jax.ShapeDtypeStruct((R_pad, D), x.dtype),
        grid_spec=pltpu.PrefetchScalarGridSpec(
            num_scalar_prefetch=0,
            grid=(R_pad // tile,),
            in_specs=[
                pl.BlockSpec((tile, D), lambda i: (i, 0)),
                pl.BlockSpec((1, D), lambda i: (0, 0)),
                pl.BlockSpec((1, D), lambda i: (0, 0)),
            ],
            out_specs=pl.BlockSpec((tile, D), lambda i: (i, 0)),
        ),
        compiler_params=pltpu.CompilerParams(
            dimension_semantics=("parallel",),
            vmem_limit_bytes=vmem_limit,
        ),
        cost_estimate=pl.CostEstimate(
            flops=7 * R_pad * D,
            transcendentals=R_pad,
            bytes_accessed=2 * R_pad * D * x_b
            + 2 * D * jnp.dtype(gamma.dtype).itemsize,
        ),
    )(xf, gamma.reshape(1, D), beta.reshape(1, D))
    if R_pad != R:
        out = out[:R]
    return out.reshape(*lead, D)


# ---------------------- fused PreNorm + Linear kernel ------------------------
def _prenorm_linear_kernel(x_ref, g_ref, b_ref, w_ref, bias_ref, o_ref, *,
                           eps, mxu_dtype):
    # Single grid axis (row tiles); the full (D_in, D_out) weight is resident
    # in VMEM for the whole grid (constant index_map -> fetched once).
    x = x_ref[...].astype(jnp.float32)
    mean = jnp.mean(x, axis=-1, keepdims=True)
    xc = x - mean
    var = jnp.mean(xc * xc, axis=-1, keepdims=True)
    inv = lax.rsqrt(var + eps)
    xn = xc * inv * g_ref[...].astype(jnp.float32) \
        + b_ref[...].astype(jnp.float32)
    acc = jnp.dot(xn.astype(mxu_dtype), w_ref[...].astype(mxu_dtype),
                  preferred_element_type=jnp.float32)
    o_ref[...] = (acc + bias_ref[...].astype(jnp.float32)).astype(o_ref.dtype)


def _choose_fused_row_tile(R, d_in, d_out_pad, x_itemsize, w_itemsize,
                           out_itemsize, align, vmem_limit):
    # Budget: resident weight (assume double-buffered allocation to be safe),
    # double-buffered x in, double-buffered out, f32 intermediates.
    resident = 2 * d_in * d_out_pad * w_itemsize
    budget = int(vmem_limit * 0.7) - resident
    per_row = (2 * d_in * x_itemsize          # x double buffer
               + 2 * d_out_pad * out_itemsize  # out double buffer
               + (d_in + d_out_pad) * 4)       # f32 LN / acc working set
    max_rows = min(1024, max(align, budget // max(per_row, 1)))
    return _balanced_row_tile(R, max_rows, align)


def pre_norm_linear(x, gamma, beta, w, b, *, eps=1e-5, mxu_dtype=None):
    """Fused PreNorm + Linear:  LayerNorm(x) @ w + b  in a single pallas_call."""
    *lead, D_in = x.shape
    D_out = w.shape[1]
    R = 1
    for s in lead:
        R *= s

    if mxu_dtype is None:
        half_in = (jnp.dtype(x.dtype).itemsize == 2
                   or jnp.dtype(w.dtype).itemsize == 2)
        mxu_dtype = jnp.bfloat16 if half_in else jnp.float32
    mxu_dtype = jnp.dtype(mxu_dtype)

    # Lane-dense output: pad D_out to a multiple of 128 (zero cols, sliced off).
    D_out_pad = _round_up(D_out, 128)
    w_p = w.astype(mxu_dtype)
    b_p = b.reshape(1, D_out)
    if D_out_pad != D_out:
        w_p = jnp.pad(w_p, ((0, 0), (0, D_out_pad - D_out)))
        b_p = jnp.pad(b_p, ((0, 0), (0, D_out_pad - D_out)))

    align = _sublane_align(x.dtype)
    vmem_limit = _vmem_limit_bytes()
    x_b = jnp.dtype(x.dtype).itemsize
    tm = _choose_fused_row_tile(R, D_in, D_out_pad, x_b, mxu_dtype.itemsize,
                                x_b, align, vmem_limit)
    R_pad = _round_up(R, tm)

    xf = x.reshape(R, D_in)
    if R_pad != R:
        xf = jnp.pad(xf, ((0, R_pad - R), (0, 0)))
    # TODO(synk): for very large D_in (>~4k) the reduction dim should also be
    # tiled (two-pass LN stats + K-tiled matmul); ViT dims fit VMEM as-is.

    out = pl.pallas_call(
        functools.partial(_prenorm_linear_kernel, eps=eps, mxu_dtype=mxu_dtype),
        out_shape=jax.ShapeDtypeStruct((R_pad, D_out_pad), x.dtype),
        grid_spec=pltpu.PrefetchScalarGridSpec(
            num_scalar_prefetch=0,
            grid=(R_pad // tm,),
            in_specs=[
                pl.BlockSpec((tm, D_in), lambda i: (i, 0)),
                pl.BlockSpec((1, D_in), lambda i: (0, 0)),
                pl.BlockSpec((1, D_in), lambda i: (0, 0)),
                # Full weight / bias, VMEM-resident for the whole grid.
                pl.BlockSpec((D_in, D_out_pad), lambda i: (0, 0)),
                pl.BlockSpec((1, D_out_pad), lambda i: (0, 0)),
            ],
            out_specs=pl.BlockSpec((tm, D_out_pad), lambda i: (i, 0)),
        ),
        compiler_params=pltpu.CompilerParams(
            # Row axis is embarrassingly parallel (megacore sharding).
            # TODO(synk): evaluate pltpu.CORE_PARALLEL on v7x with >=2 row tiles.
            dimension_semantics=("parallel",),
            vmem_limit_bytes=vmem_limit,
        ),
        cost_estimate=pl.CostEstimate(
            flops=2 * R_pad * D_in * D_out_pad + 7 * R_pad * D_in,
            transcendentals=R_pad,
            bytes_accessed=(R_pad * D_in * x_b
                            + 2 * D_in * jnp.dtype(gamma.dtype).itemsize
                            + D_in * D_out_pad * mxu_dtype.itemsize
                            + D_out_pad * jnp.dtype(b.dtype).itemsize
                            + R_pad * D_out_pad * x_b),
        ),
    )(xf, gamma.reshape(1, D_in), beta.reshape(1, D_in), w_p, b_p)

    out = out[:R, :D_out]
    return out.reshape(*lead, D_out)


# --------------------------------- PreNorm -----------------------------------
def pre_norm(x, gamma, beta, fn, *, eps=1e-5, **kwargs):
    """fn(LayerNorm(x), **kwargs) — same semantics as the PyTorch module.

    When `fn` is a Linear projection, prefer `pre_norm_linear`, which fuses the
    norm into the matmul and avoids an HBM round-trip of the normalized
    activation.
    """
    return fn(layer_norm(x, gamma, beta, eps=eps), **kwargs)


if __name__ == "__main__":
    key = jax.random.PRNGKey(0)
    B, N, D = 2, 8, 32

    kx, kw, kb = jax.random.split(key, 3)
    x = jax.random.normal(kx, (B, N, D), dtype=jnp.float32)

    # LayerNorm params (PyTorch default init: weight=1, bias=0).
    gamma = jnp.ones((D,), dtype=jnp.float32)
    beta = jnp.zeros((D,), dtype=jnp.float32)

    # Deterministic params for the demo `fn` (a Linear D -> D).
    w = jax.random.normal(kw, (D, D), dtype=jnp.float32) * 0.02
    b = jax.random.normal(kb, (D,), dtype=jnp.float32) * 0.02

    # Reference in plain JAX.
    mean = jnp.mean(x, axis=-1, keepdims=True)
    var = jnp.mean((x - mean) ** 2, axis=-1, keepdims=True)
    ln_ref = (x - mean) / jnp.sqrt(var + 1e-5) * gamma + beta
    ref = jnp.einsum("bnd,de->bne", ln_ref, w) + b

    # Fast path: fn == Linear, fully fused, f32 MXU operands.
    out = jax.block_until_ready(pre_norm_linear(x, gamma, beta, w, b))
    assert out.shape == (B, N, D)
    assert jnp.allclose(out, ref, atol=1e-4, rtol=1e-4)

    # Fast path with bf16 MXU operands (v6e/v7x throughput path) — looser tol.
    out_bf16 = jax.block_until_ready(
        pre_norm_linear(x, gamma, beta, w, b, mxu_dtype=jnp.bfloat16))
    assert jnp.allclose(out_bf16, ref, atol=3e-2, rtol=3e-2)

    # Generic path: Pallas LayerNorm kernel + arbitrary callable `fn`.
    out_generic = jax.block_until_ready(
        pre_norm(x, gamma, beta, lambda h: jnp.einsum("bnd,de->bne", h, w) + b))
    assert jnp.allclose(out_generic, ref, atol=1e-4, rtol=1e-4)

    print("KERNEL_OK")
</pallas_src>

<mosaic_0001>
module attributes {stable_mosaic.version = 11 : i64} {
  func.func @_prenorm_linear_kernel(%arg0: i32, %arg1: memref<16x32xf32, #tpu.memory_space<vmem>>, %arg2: memref<1x32xf32, #tpu.memory_space<vmem>>, %arg3: memref<1x32xf32, #tpu.memory_space<vmem>>, %arg4: memref<32x128xf32, #tpu.memory_space<vmem>>, %arg5: memref<1x128xf32, #tpu.memory_space<vmem>>, %arg6: memref<16x128xf32, #tpu.memory_space<vmem>>) attributes {dimension_semantics = [#tpu.dimension_semantics<parallel>], iteration_bounds = array<i64: 1>, scalar_prefetch = 0 : i64, scratch_operands = 0 : i64, tpu.core_type = #tpu.core_type<tc>, window_params = [{transform_indices = @transform_0, window_bounds = array<i64: 16, 32>}, {pipeline_mode = #tpu.pipeline_mode<synchronous>, transform_indices = @transform_1, window_bounds = array<i64: 1, 32>}, {pipeline_mode = #tpu.pipeline_mode<synchronous>, transform_indices = @transform_2, window_bounds = array<i64: 1, 32>}, {pipeline_mode = #tpu.pipeline_mode<synchronous>, transform_indices = @transform_3, window_bounds = array<i64: 32, 128>}, {pipeline_mode = #tpu.pipeline_mode<synchronous>, transform_indices = @transform_4, window_bounds = array<i64: 1, 128>}, {transform_indices = @transform_5, window_bounds = array<i64: 16, 128>}]} {
    %c0 = arith.constant 0 : index
    %c0_0 = arith.constant 0 : index
    %0 = vector.load %arg1[%c0, %c0_0] : memref<16x32xf32, #tpu.memory_space<vmem>>, vector<16x32xf32>
    %cst = arith.constant dense<0.000000e+00> : vector<16xf32>
    %1 = vector.multi_reduction <add>, %0, %cst [1] : vector<16x32xf32> to vector<16xf32>
    %2 = vector.shape_cast %1 : vector<16xf32> to vector<16x1xf32>
    %cst_1 = arith.constant 3.200000e+01 : f32
    %3 = vector.broadcast %cst_1 : f32 to vector<16x1xf32>
    %4 = arith.divf %2, %3 : vector<16x1xf32>
    %5 = vector.broadcast %4 : vector<16x1xf32> to vector<16x32xf32>
    %6 = arith.subf %0, %5 : vector<16x32xf32>
    %7 = arith.mulf %6, %6 : vector<16x32xf32>
    %cst_2 = arith.constant dense<0.000000e+00> : vector<16xf32>
    %8 = vector.multi_reduction <add>, %7, %cst_2 [1] : vector<16x32xf32> to vector<16xf32>
    %9 = vector.shape_cast %8 : vector<16xf32> to vector<16x1xf32>
    %cst_3 = arith.constant 3.200000e+01 : f32
    %10 = vector.broadcast %cst_3 : f32 to vector<16x1xf32>
    %11 = arith.divf %9, %10 : vector<16x1xf32>
    %cst_4 = arith.constant 9.99999974E-6 : f32
    %12 = vector.broadcast %cst_4 : f32 to vector<16x1xf32>
    %13 = arith.addf %11, %12 : vector<16x1xf32>
    %14 = math.rsqrt %13 : vector<16x1xf32>
    %15 = vector.broadcast %14 : vector<16x1xf32> to vector<16x32xf32>
    %16 = arith.mulf %6, %15 : vector<16x32xf32>
    %c0_5 = arith.constant 0 : index
    %c0_6 = arith.constant 0 : index
    %17 = vector.load %arg2[%c0_5, %c0_6] : memref<1x32xf32, #tpu.memory_space<vmem>>, vector<1x32xf32>
    %18 = vector.broadcast %17 : vector<1x32xf32> to vector<16x32xf32>
    %19 = arith.mulf %16, %18 : vector<16x32xf32>
    %c0_7 = arith.constant 0 : index
    %c0_8 = arith.constant 0 : index
    %20 = vector.load %arg3[%c0_7, %c0_8] : memref<1x32xf32, #tpu.memory_space<vmem>>, vector<1x32xf32>
    %21 = vector.broadcast %20 : vector<1x32xf32> to vector<16x32xf32>
    %22 = arith.addf %19, %21 : vector<16x32xf32>
    %c0_9 = arith.constant 0 : index
    %c0_10 = arith.constant 0 : index
    %23 = vector.load %arg4[%c0_9, %c0_10] : memref<32x128xf32, #tpu.memory_space<vmem>>, vector<32x128xf32>
    %cst_11 = arith.constant dense<0.000000e+00> : vector<16x128xf32>
    %24 = tpu.matmul %22, %23, %cst_11 {dimension_numbers = #tpu.dot_dimension_numbers<[1], [0], [0], [1], [0, 0, 1, 1], [], []>} : vector<16x32xf32>, vector<32x128xf32>, vector<16x128xf32> -> vector<16x128xf32>
    %c0_12 = arith.constant 0 : index
    %c0_13 = arith.constant 0 : index
    %25 = vector.load %arg5[%c0_12, %c0_13] : memref<1x128xf32, #tpu.memory_space<vmem>>, vector<1x128xf32>
    %26 = vector.broadcast %25 : vector<1x128xf32> to vector<16x128xf32>
    %27 = arith.addf %24, %26 : vector<16x128xf32>
    %c0_14 = arith.constant 0 : index
    %c0_15 = arith.constant 0 : index
    %28 = vector.load %arg6[%c0_14, %c0_15] : memref<16x128xf32, #tpu.memory_space<vmem>>, vector<16x128xf32>
    tpu.vector_store %arg6[%c0_14, %c0_15], %27 {strides = array<i32>} : memref<16x128xf32, #tpu.memory_space<vmem>>, vector<16x128xf32>,
    return
  }
  func.func @transform_0(%arg0: i32) -> (i32, i32) {
    %c0_i32 = arith.constant 0 : i32
    %c0_i32_0 = arith.constant 0 : i32
    return %arg0, %c0_i32 : i32, i32
  }
  func.func @transform_1(%arg0: i32) -> (i32, i32) {
    %c0_i32 = arith.constant 0 : i32
    %c0_i32_0 = arith.constant 0 : i32
    %c0_i32_1 = arith.constant 0 : i32
    return %c0_i32, %c0_i32_0 : i32, i32
  }
  func.func @transform_2(%arg0: i32) -> (i32, i32) {
    %c0_i32 = arith.constant 0 : i32
    %c0_i32_0 = arith.constant 0 : i32
    %c0_i32_1 = arith.constant 0 : i32
    return %c0_i32, %c0_i32_0 : i32, i32
  }
  func.func @transform_3(%arg0: i32) -> (i32, i32) {
    %c0_i32 = arith.constant 0 : i32
    %c0_i32_0 = arith.constant 0 : i32
    %c0_i32_1 = arith.constant 0 : i32
    return %c0_i32, %c0_i32_0 : i32, i32
  }
  func.func @transform_4(%arg0: i32) -> (i32, i32) {
    %c0_i32 = arith.constant 0 : i32
    %c0_i32_0 = arith.constant 0 : i32
    %c0_i32_1 = arith.constant 0 : i32
    return %c0_i32, %c0_i32_0 : i32, i32
  }
  func.func @transform_5(%arg0: i32) -> (i32, i32) {
    %c0_i32 = arith.constant 0 : i32
    %c0_i32_0 = arith.constant 0 : i32
    return %arg0, %c0_i32 : i32, i32
  }
}

</mosaic_0001>

<llo_original>
// kernel: tpu_custom_call.1
$region0: #{tpu_custom_call.1}
  #allocation0 [shape = 'u32[]', space=smem, size = 0x4, offset = 0x4, fixed_abs, tag = 'smem constant byte address 0x4 - core index']
  #allocation1 [shape = 'u32[144,128]{1,0:T(1,128)}', space=vmem, size = 0x12000, scoped, tag = 'internal scratch']
  %s0 = inlined_call_operand.hbm [shape: f32[16,32], index: 0, kind: input, shape index: {}]
  %s1 = inlined_call_operand.vmem [shape: f32[1,32], index: 1, kind: input, shape index: {}]
  %s2 = inlined_call_operand.vmem [shape: f32[1,32], index: 2, kind: input, shape index: {}]
  %s3 = inlined_call_operand.hbm [shape: f32[32,128], index: 3, kind: input, shape index: {}]
  %s4 = inlined_call_operand.vmem [shape: f32[1,128], index: 4, kind: input, shape index: {}]
  %s5 = inlined_call_operand.hbm [shape: f32[16,128], index: 5, kind: output, shape index: {}]
  %s6 = sld [smem:[#allocation0]]
  $region38: #{tpu_custom_call.1} parent=0
    _
  %s8 = ssub.s32 1, %s6
  %s9 = scalar_select 0, %s8, %s6
  $region1: #{tpu_custom_call.1} parent=0
    #allocation2 [shape = 'u8[8192]{0}', space=vmem, size = 0x2000, scoped, tag = 'input window, operand 0, single buffered']
    #allocation3 [shape = 's32[1]{0}', space=sflag, size = 0x4, scoped, tag = 'scoped memory for tpu_custom_call.1']
    #allocation4 [shape = 's32[1]{0}', space=sflag, size = 0x4, scoped, tag = 'scoped memory for tpu_custom_call.1']
    #allocation5 [shape = 'u8[16384]{0}', space=vmem, size = 0x4000, scoped, tag = 'input window, operand 3, single buffered']
    #allocation6 [shape = 's32[1]{0}', space=sflag, size = 0x4, scoped, tag = 'scoped memory for tpu_custom_call.1']
    #allocation7 [shape = 'u8[8192]{0}', space=vmem, size = 0x2000, scoped, tag = 'output window, operand 0, single buffered']
    %10 = vsyncpa [#allocation3], 0
    %11 = vsyncpa [#allocation6], 0
    %12 = vsyncpa [#allocation4], 0
    // Predicated region
    $region2: #{tpu_custom_call.1} parent=1 // pred_check
      _
    $region3: #{tpu_custom_call.1} parent=1 // pred_check_branch
      %14 = sbr.rel (0) target = $region5
    $region4: #{tpu_custom_call.1} parent=1 // pred_region
      %s16 = ssub.s32 256, 256
      %17 = vsyncadd [#allocation3], %s16
      %s18 = sshll.u32 [#allocation2], 4
      %s19 = int_to_ptr.vmem [resolvable:$true] %s18
      %24 = dma.hbm_to_vmem [thread:$0]  %s0, 256, %s19, [#allocation3], 128, 128, 8
    $region5: #{tpu_custom_call.1} parent=1 // pred_fallthru
      _
    // Predicated region
    $region6: #{tpu_custom_call.1} parent=1 // pred_check
      _
    $region7: #{tpu_custom_call.1} parent=1 // pred_check_branch
      %26 = sbr.rel (0) target = $region9
    $region8: #{tpu_custom_call.1} parent=1 // pred_region
      _
    $region9: #{tpu_custom_call.1} parent=1 // pred_fallthru
      _
    // Predicated region
    $region10: #{tpu_custom_call.1} parent=1 // pred_check
      _
    $region11: #{tpu_custom_call.1} parent=1 // pred_check_branch
      %28 = sbr.rel (0) target = $region13
    $region12: #{tpu_custom_call.1} parent=1 // pred_region
      _
    $region13: #{tpu_custom_call.1} parent=1 // pred_fallthru
      _
    // Predicated region
    $region14: #{tpu_custom_call.1} parent=1 // pred_check
      _
    $region15: #{tpu_custom_call.1} parent=1 // pred_check_branch
      %30 = sbr.rel (0) target = $region17
    $region16: #{tpu_custom_call.1} parent=1 // pred_region
      %s32 = ssub.s32 512, 512
      %33 = vsyncadd [#allocation6], %s32
      %s34 = sshll.u32 [#allocation5], 4
      %s35 = int_to_ptr.vmem [resolvable:$true] %s34
      %40 = dma.hbm_to_vmem [thread:$0]  %s3, 512, %s35, [#allocation6], 128, 128, 8
    $region17: #{tpu_custom_call.1} parent=1 // pred_fallthru
      _
    // Predicated region
    $region18: #{tpu_custom_call.1} parent=1 // pred_check
      _
    $region19: #{tpu_custom_call.1} parent=1 // pred_check_branch
      %42 = sbr.rel (0) target = $region21
    $region20: #{tpu_custom_call.1} parent=1 // pred_region
      _
    $region21: #{tpu_custom_call.1} parent=1 // pred_fallthru
      _
    // Predicated region
    $region22: #{tpu_custom_call.1} parent=1 // pred_check
      _
    $region23: #{tpu_custom_call.1} parent=1 // pred_check_branch
      %44 = sbr.rel (0) target = $region25
    $region24: #{tpu_custom_call.1} parent=1 // pred_region
      %45 = dma.done [#allocation3], 256
    $region25: #{tpu_custom_call.1} parent=1 // pred_fallthru
      _
    // Predicated region
    $region26: #{tpu_custom_call.1} parent=1 // pred_check
      _
    $region27: #{tpu_custom_call.1} parent=1 // pred_check_branch
      %47 = sbr.rel (0) target = $region29
    $region28: #{tpu_custom_call.1} parent=1 // pred_region
      %48 = dma.done [#allocation6], 512
    $region29: #{tpu_custom_call.1} parent=1 // pred_fallthru
      _
    %v49 = vld [vmem:[#allocation2] sm:$0xff]
    %v50 = vld [vmem:[#allocation2 + $0x8] sm:$0xff]
    %vm51 = vcmask 261120
    %v52 = vsel %vm51, %v49, 0.0
    %53 = vadd.xlane.f32.xlu0 %v52
    %v54 = vpop.xlane.xlu0 %53
    %v55 = vsel %vm51, %v50, 0.0
    %56 = vadd.xlane.f32.xlu0 %v55
    %v57 = vpop.xlane.xlu0 %56
    %v58 = vrcp.pop 32.0
    %v59 = vmul.f32 %v54, %v58
    %v60 = vmul.f32 %v57, %v58
    %v61 = vsub.f32 %v49, %v59
    %v62 = vsub.f32 %v50, %v60
    %v63 = vmul.f32 %v61, %v61
    %v64 = vmul.f32 %v62, %v62
    %v65 = vsel %vm51, %v63, 0.0
    %66 = vadd.xlane.f32.xlu0 %v65
    %v67 = vpop.xlane.xlu0 %66
    %v68 = vsel %vm51, %v64, 0.0
    %69 = vadd.xlane.f32.xlu0 %v68
    %v70 = vpop.xlane.xlu0 %69
    %v71 = vmul.f32 %v67, %v58
    %v72 = vmul.f32 %v70, %v58
    %v73 = vadd.f32 %v71, 1e-05
    %v74 = vadd.f32 %v72, 1e-05
    %v75 = vrsqrt.pop %v73
    %v76 = vrsqrt.pop %v74
    %v77 = vmul.f32 %v61, %v75
    %v78 = vmul.f32 %v62, %v76
    %v79 = vld [vmem:[%s1] sm:$0x1]
    %v81 = vlaneseq
    %v82 = vshrl.u32 %v81, 7
    %v83 = vsub.s32 0, %v82
    %v84 = vrot.slane %v79, %v83
    %v86 = vmul.f32 %v77, %v84
    %v87 = vmul.f32 %v78, %v84
    %v88 = vld [vmem:[%s2] sm:$0x1]
    %v90 = vlaneseq
    %v91 = vshrl.u32 %v90, 7
    %v92 = vsub.s32 0, %v91
    %v93 = vrot.slane %v88, %v92
    %v95 = vadd.f32 %v86, %v93
    %v96 = vadd.f32 %v87, %v93
    %v97 = vld [vmem:[#allocation5] sm:$0xff]
    %v98 = vld [vmem:[#allocation5 + $0x8] sm:$0xff]
    %v99 = vld [vmem:[#allocation5 + $0x10] sm:$0xff]
    %v100 = vld [vmem:[#allocation5 + $0x18] sm:$0xff]
    %v101 = vld [vmem:[%s4] sm:$0x1]
    %v103 = vlaneseq
    %v104 = vshrl.u32 %v103, 7
    %v105 = vsub.s32 0, %v104
    %v106 = vrot.slane %v101, %v105
    %v109 = vsel %vm51, %v95, 0
    %v112 = vsel %vm51, %v96, 0
    %114 = vmatprep.subr.mxu0 0.0
    %115 = vmatpush1.msra.mxu0 0.0
    %116 = vmatprep.subr.mxu0 0.0
    %117 = vmatpush1.msra.mxu0 0.0
    %118 = vmatprep.subr.mxu0 0.0
    %119 = vmatpush1.msra.mxu0 0.0
    %120 = vmatprep.subr.mxu0 0.0
    %121 = vmatpush1.msra.mxu0 0.0
    %122 = vmatprep.subr.mxu0 0.0
    %123 = vmatpush1.msra.mxu0 0.0
    %124 = vmatprep.subr.mxu0 0.0
    %125 = vmatpush1.msra.mxu0 0.0
    %126 = vmatprep.subr.mxu0 0.0
    %127 = vmatpush1.msra.mxu0 0.0
    %128 = vmatprep.subr.mxu0 0.0
    %129 = vmatpush1.msra.mxu0 0.0
    %130 = vmatprep.subr.mxu0 0.0
    %131 = vmatpush1.msra.mxu0 0.0
    %132 = vmatprep.subr.mxu0 0.0
    %133 = vmatpush1.msra.mxu0 0.0
    %134 = vmatprep.subr.mxu0 0.0
    %135 = vmatpush1.msra.mxu0 0.0
    %136 = vmatprep.subr.mxu0 0.0
    %137 = vmatpush1.msra.mxu0 0.0
    %138 = vmatprep.subr.mxu0 0.0
    %139 = vmatpush1.msra.mxu0 %v100
    %140 = vmatprep.subr.mxu0 0.0
    %141 = vmatpush1.msra.mxu0 %v99
    %142 = vmatprep.subr.mxu0 0.0
    %143 = vmatpush1.msra.mxu0 %v98
    %144 = vmatprep.subr.mxu0 0.0
    %145 = vmatpush1.msra.mxu0 %v97
    %146 = vmatprep.subr.mxu0 0.0
    %147 = vmatpush2.msra.mxu0 0.0
    %148 = vmatprep.subr.mxu0 0.0
    %149 = vmatpush2.msra.mxu0 0.0
    %150 = vmatprep.subr.mxu0 0.0
    %151 = vmatpush2.msra.mxu0 0.0
    %152 = vmatprep.subr.mxu0 0.0
    %153 = vmatpush2.msra.mxu0 0.0
    %154 = vmatprep.subr.mxu0 0.0
    %155 = vmatpush2.msra.mxu0 0.0
    %156 = vmatprep.subr.mxu0 0.0
    %157 = vmatpush2.msra.mxu0 0.0
    %158 = vmatprep.subr.mxu0 0.0
    %159 = vmatpush2.msra.mxu0 0.0
    %160 = vmatprep.subr.mxu0 0.0
    %161 = vmatpush2.msra.mxu0 0.0
    %162 = vmatprep.subr.mxu0 0.0
    %163 = vmatpush2.msra.mxu0 0.0
    %164 = vmatprep.subr.mxu0 0.0
    %165 = vmatpush2.msra.mxu0 0.0
    %166 = vmatprep.subr.mxu0 0.0
    %167 = vmatpush2.msra.mxu0 0.0
    %168 = vmatprep.subr.mxu0 0.0
    %169 = vmatpush2.msra.mxu0 0.0
    %170 = vmatprep.subr.mxu0 0.0
    %171 = vmatpush2.msra.mxu0 0.0
    %172 = vmatprep.subr.mxu0 0.0
    %173 = vmatpush2.msra.mxu0 0.0
    %174 = vmatprep.subr.mxu0 0.0
    %175 = vmatpush2.msra.mxu0 0.0
    %176 = vmatprep.subr.mxu0 0.0
    %177 = vmatpush2.msra.mxu0 0.0
    %178 = vmatprep.mubr.f32.mxu0 0.0
    %179 = vmatmul.mubr.f32.gmra.mxu0 %v109
    %v180 = vpop.f32.mrf.mxu0
    %v181 = vadd.f32 %v106, %v180
    %v182 = vpop.f32.mrf.mxu0
    %183 = vmatprep.mubr.f32.mxu0 0.0
    %184 = vmatmul.mubr.f32.gmra.mxu0 %v112
    %v185 = vpop.f32.mrf.mxu0
    %v186 = vadd.f32 %v106, %v185
    %v187 = vpop.f32.mrf.mxu0
    %188 = vdwg.mxu0
    %189 = vst [vmem:[#allocation7] sm:$0xff] %v181
    %190 = vst [vmem:[#allocation7 + $0x8] sm:$0xff] %v186
    // Predicated region
    $region30: #{tpu_custom_call.1} parent=1 // pred_check
      _
    $region31: #{tpu_custom_call.1} parent=1 // pred_check_branch
      %192 = sbr.rel (0) target = $region33
    $region32: #{tpu_custom_call.1} parent=1 // pred_region
      %s194 = ssub.s32 256, 256
      %195 = vsyncadd [#allocation4], %s194
      %s196 = sshll.u32 [#allocation7], 4
      %s197 = int_to_ptr.vmem [resolvable:$true] %s196
      %202 = dma.vmem_to_hbm [thread:$0]  %s197, 256, %s5, [#allocation4], 128, 128, 8
    $region33: #{tpu_custom_call.1} parent=1 // pred_fallthru
      _
    // Predicated region
    $region34: #{tpu_custom_call.1} parent=1 // pred_check
      _
    $region35: #{tpu_custom_call.1} parent=1 // pred_check_branch
      %204 = sbr.rel (0) target = $region37
    $region36: #{tpu_custom_call.1} parent=1 // pred_region
      %205 = dma.done [#allocation4], 256
    $region37: #{tpu_custom_call.1} parent=1 // pred_fallthru
      _
    %206 = vsyncpa [#allocation3], 1
    %207 = vsyncpa [#allocation6], 1
    %208 = vsyncpa [#allocation4], 1

</llo_original>
